<compile_context>
chip_gen: v7x
topology: tpu7x:2x2x1
jax: 0.10.0
libtpu: 0.0.40
codegen_flags: <defaults>
</compile_context>

<pallas_src>
import functools

import jax
import jax.numpy as jnp
from jax.experimental import pallas as pl
from jax.experimental.pallas import tpu as pltpu

HIDDEN = 128
LANE = 128


def _round_up(n, m):
    return ((n + m - 1) // m) * m


def encoder_kernel(x_ref, w1_ref, b1_ref, w2_ref, b2_ref, out_ref):
    # fc1: bf16 operands on the MXU, f32 accumulation; bias + ReLU in f32 (VPU).
    h = jnp.dot(x_ref[...], w1_ref[...], preferred_element_type=jnp.float32)
    h = jnp.maximum(h + b1_ref[...], 0.0)
    # Fused, zero-padded heads: one lane-dense (tb, out_pad) GEMM + dense store.
    o = jnp.dot(h.astype(w2_ref.dtype), w2_ref[...],
                preferred_element_type=jnp.float32)
    out_ref[...] = (o + b2_ref[...]).astype(out_ref.dtype)


def _pick_block_b(B, input_dim, out_pad, vmem_tile_budget=24 << 20):
    """Batch-tile size from a VMEM budget + megacore (>=2 grid steps) cap."""
    if B <= 256:
        # Tiny kernel: per-grid-step overhead dominates; take the whole batch.
        return B
    # Bytes per batch row held live in VMEM: double-buffered bf16 x tile +
    # double-buffered f32 out tile.
    per_row = 2 * input_dim * 2 + 2 * out_pad * 4
    # Resident (constant-index) weights/biases.
    resident = (input_dim * HIDDEN * 2 + HIDDEN * 4
                + HIDDEN * out_pad * 2 + out_pad * 4)
    tb_vmem = max(8, (vmem_tile_budget - resident) // max(per_row, 1))
    # v7x: 2 TensorCores -> want at least 2 grid steps on the "parallel" axis.
    tb_cores = _round_up(pl.cdiv(B, 2), 8)
    tb = min(2048, tb_vmem, tb_cores, _round_up(B, 8))
    return max(8, (tb // 8) * 8)


def encoder_forward(x, fused, *, latent_dim):
    """x: (B, input_dim) f32.  fused: dict with pre-fused/padded head params."""
    B, input_dim = x.shape
    two_l = 2 * latent_dim
    out_pad = fused["w2"].shape[1]  # lane-dense padded width (multiple of 128)

    tb = _pick_block_b(B, input_dim, out_pad)
    grid = (pl.cdiv(B, tb),)

    # MXU operands in bf16 (native on v5e/v6e/v7x); accumulation stays f32.
    x_bf = x.astype(jnp.bfloat16)

    flops = 2 * B * (input_dim * HIDDEN + HIDDEN * out_pad)
    bytes_accessed = int(
        x_bf.size * 2
        + fused["w1"].size * 2 + fused["b1"].size * 4
        + fused["w2"].size * 2 + fused["b2"].size * 4
        + B * out_pad * 4)

    # Explicit VMEM limit: double-buffered x/out tiles + resident weights
    # (counted x2 for pipeline buffers) + headroom; clamped to be v7x-safe.
    vmem_need = (2 * tb * input_dim * 2 + 2 * tb * out_pad * 4
                 + 2 * (input_dim * HIDDEN * 2 + HIDDEN * 4
                        + HIDDEN * out_pad * 2 + out_pad * 4))
    vmem_limit = int(min(64 << 20, max(32 << 20, vmem_need + (4 << 20))))

    out = pl.pallas_call(
        encoder_kernel,
        out_shape=jax.ShapeDtypeStruct((B, out_pad), jnp.float32),
        grid=grid,
        in_specs=[
            pl.BlockSpec((tb, input_dim), lambda i: (i, 0)),      # x: blocked on B
            pl.BlockSpec((input_dim, HIDDEN), lambda i: (0, 0)),  # w1 (resident)
            pl.BlockSpec((1, HIDDEN), lambda i: (0, 0)),          # b1 (resident)
            pl.BlockSpec((HIDDEN, out_pad), lambda i: (0, 0)),    # [wm|wl|0]
            pl.BlockSpec((1, out_pad), lambda i: (0, 0)),         # [bm|bl|0]
        ],
        out_specs=pl.BlockSpec((tb, out_pad), lambda i: (i, 0)),
        compiler_params=pltpu.CompilerParams(
            dimension_semantics=("parallel",),
            vmem_limit_bytes=vmem_limit),
        cost_estimate=pl.CostEstimate(
            flops=flops, transcendentals=0, bytes_accessed=bytes_accessed),
    )(x_bf, fused["w1"], fused["b1"], fused["w2"], fused["b2"])

    mean = out[:, :latent_dim]
    logvar = out[:, latent_dim:two_l]
    return mean, logvar


def init_encoder_params(key, input_dim, latent_dim, hidden=HIDDEN):
    """Deterministic synthetic parameters (stored as (in, out), i.e. the
    transpose of PyTorch's nn.Linear (out, in) weight layout)."""
    k1, k2, k3, k4, k5, k6 = jax.random.split(key, 6)
    w1 = jax.random.normal(k1, (input_dim, hidden), jnp.float32) * 0.05
    b1 = jax.random.normal(k2, (1, hidden), jnp.float32) * 0.05
    wm = jax.random.normal(k3, (hidden, latent_dim), jnp.float32) * 0.05
    bm = jax.random.normal(k4, (1, latent_dim), jnp.float32) * 0.05
    wl = jax.random.normal(k5, (hidden, latent_dim), jnp.float32) * 0.05
    bl = jax.random.normal(k6, (1, latent_dim), jnp.float32) * 0.05
    return {"w1": w1, "b1": b1, "wm": wm, "bm": bm, "wl": wl, "bl": bl}


def fuse_encoder_params(p):
    """One-time (outside jit) fusion of the two heads into a single GEMM whose
    output width is zero-padded to a lane-dense multiple of 128."""
    latent_dim = p["wm"].shape[1]
    two_l = 2 * latent_dim
    out_pad = _round_up(two_l, LANE)
    w2 = jnp.concatenate([p["wm"], p["wl"]], axis=1)
    b2 = jnp.concatenate([p["bm"], p["bl"]], axis=1)
    w2 = jnp.pad(w2, ((0, 0), (0, out_pad - two_l)))
    b2 = jnp.pad(b2, ((0, 0), (0, out_pad - two_l)))
    return {
        "w1": p["w1"].astype(jnp.bfloat16),
        "b1": p["b1"].astype(jnp.float32),
        "w2": w2.astype(jnp.bfloat16),
        "b2": b2.astype(jnp.float32),
    }


def encoder_reference(x, p):
    h = jnp.maximum(x @ p["w1"] + p["b1"], 0.0)
    return h @ p["wm"] + p["bm"], h @ p["wl"] + p["bl"]


if __name__ == "__main__":
    B, INPUT_DIM, LATENT_DIM = 8, 32, 16

    key = jax.random.PRNGKey(0)
    k_x, k_p = jax.random.split(key)
    x = jax.random.normal(k_x, (B, INPUT_DIM), jnp.float32)
    params = init_encoder_params(k_p, INPUT_DIM, LATENT_DIM)
    fused = fuse_encoder_params(params)

    fwd = jax.jit(encoder_forward, static_argnames="latent_dim")
    mean, logvar = fwd(x, fused, latent_dim=LATENT_DIM)
    jax.block_until_ready((mean, logvar))

    # Sanity check against the plain-JAX f32 reference of the unfused math.
    # bf16 MXU operands -> loosened tolerances vs. the old 1e-5.
    mean_ref, logvar_ref = encoder_reference(x, params)
    assert mean.shape == (B, LATENT_DIM) and logvar.shape == (B, LATENT_DIM)
    assert jnp.allclose(mean, mean_ref, atol=5e-2, rtol=5e-2)
    assert jnp.allclose(logvar, logvar_ref, atol=5e-2, rtol=5e-2)

    print("KERNEL_OK")
</pallas_src>

<mosaic_0001>
module attributes {stable_mosaic.version = 11 : i64} {
  func.func @encoder_kernel(%arg0: i32, %arg1: memref<8x32xbf16, #tpu.memory_space<vmem>>, %arg2: memref<32x128xbf16, #tpu.memory_space<vmem>>, %arg3: memref<1x128xf32, #tpu.memory_space<vmem>>, %arg4: memref<128x128xbf16, #tpu.memory_space<vmem>>, %arg5: memref<1x128xf32, #tpu.memory_space<vmem>>, %arg6: memref<8x128xf32, #tpu.memory_space<vmem>>) attributes {dimension_semantics = [#tpu.dimension_semantics<parallel>], iteration_bounds = array<i64: 1>, scalar_prefetch = 0 : i64, scratch_operands = 0 : i64, tpu.core_type = #tpu.core_type<tc>, window_params = [{transform_indices = @transform_0, window_bounds = array<i64: 8, 32>}, {pipeline_mode = #tpu.pipeline_mode<synchronous>, transform_indices = @transform_1, window_bounds = array<i64: 32, 128>}, {pipeline_mode = #tpu.pipeline_mode<synchronous>, transform_indices = @transform_2, window_bounds = array<i64: 1, 128>}, {pipeline_mode = #tpu.pipeline_mode<synchronous>, transform_indices = @transform_3, window_bounds = array<i64: 128, 128>}, {pipeline_mode = #tpu.pipeline_mode<synchronous>, transform_indices = @transform_4, window_bounds = array<i64: 1, 128>}, {transform_indices = @transform_5, window_bounds = array<i64: 8, 128>}]} {
    %c0 = arith.constant 0 : index
    %c0_0 = arith.constant 0 : index
    %0 = vector.load %arg1[%c0, %c0_0] : memref<8x32xbf16, #tpu.memory_space<vmem>>, vector<8x32xbf16>
    %c0_1 = arith.constant 0 : index
    %c0_2 = arith.constant 0 : index
    %1 = vector.load %arg2[%c0_1, %c0_2] : memref<32x128xbf16, #tpu.memory_space<vmem>>, vector<32x128xbf16>
    %cst = arith.constant dense<0.000000e+00> : vector<8x128xf32>
    %2 = tpu.matmul %0, %1, %cst {dimension_numbers = #tpu.dot_dimension_numbers<[1], [0], [0], [1], [0, 0, 1, 1], [], []>} : vector<8x32xbf16>, vector<32x128xbf16>, vector<8x128xf32> -> vector<8x128xf32>
    %c0_3 = arith.constant 0 : index
    %c0_4 = arith.constant 0 : index
    %3 = vector.load %arg3[%c0_3, %c0_4] : memref<1x128xf32, #tpu.memory_space<vmem>>, vector<1x128xf32>
    %4 = vector.broadcast %3 : vector<1x128xf32> to vector<8x128xf32>
    %5 = arith.addf %2, %4 : vector<8x128xf32>
    %cst_5 = arith.constant 0.000000e+00 : f32
    %6 = vector.broadcast %cst_5 : f32 to vector<8x128xf32>
    %7 = arith.maximumf %5, %6 : vector<8x128xf32>
    %8 = arith.truncf %7 : vector<8x128xf32> to vector<8x128xbf16>
    %c0_6 = arith.constant 0 : index
    %c0_7 = arith.constant 0 : index
    %9 = vector.load %arg4[%c0_6, %c0_7] : memref<128x128xbf16, #tpu.memory_space<vmem>>, vector<128x128xbf16>
    %cst_8 = arith.constant dense<0.000000e+00> : vector<8x128xf32>
    %10 = tpu.matmul %8, %9, %cst_8 {dimension_numbers = #tpu.dot_dimension_numbers<[1], [0], [0], [1], [0, 0, 1, 1], [], []>} : vector<8x128xbf16>, vector<128x128xbf16>, vector<8x128xf32> -> vector<8x128xf32>
    %c0_9 = arith.constant 0 : index
    %c0_10 = arith.constant 0 : index
    %11 = vector.load %arg5[%c0_9, %c0_10] : memref<1x128xf32, #tpu.memory_space<vmem>>, vector<1x128xf32>
    %12 = vector.broadcast %11 : vector<1x128xf32> to vector<8x128xf32>
    %13 = arith.addf %10, %12 : vector<8x128xf32>
    %c0_11 = arith.constant 0 : index
    %c0_12 = arith.constant 0 : index
    %14 = vector.load %arg6[%c0_11, %c0_12] : memref<8x128xf32, #tpu.memory_space<vmem>>, vector<8x128xf32>
    tpu.vector_store %arg6[%c0_11, %c0_12], %13 {strides = array<i32>} : memref<8x128xf32, #tpu.memory_space<vmem>>, vector<8x128xf32>,
    return
  }
  func.func @transform_0(%arg0: i32) -> (i32, i32) {
    %c0_i32 = arith.constant 0 : i32
    %c0_i32_0 = arith.constant 0 : i32
    return %arg0, %c0_i32 : i32, i32
  }
  func.func @transform_1(%arg0: i32) -> (i32, i32) {
    %c0_i32 = arith.constant 0 : i32
    %c0_i32_0 = arith.constant 0 : i32
    %c0_i32_1 = arith.constant 0 : i32
    return %c0_i32, %c0_i32_0 : i32, i32
  }
  func.func @transform_2(%arg0: i32) -> (i32, i32) {
    %c0_i32 = arith.constant 0 : i32
    %c0_i32_0 = arith.constant 0 : i32
    %c0_i32_1 = arith.constant 0 : i32
    return %c0_i32, %c0_i32_0 : i32, i32
  }
  func.func @transform_3(%arg0: i32) -> (i32, i32) {
    %c0_i32 = arith.constant 0 : i32
    %c0_i32_0 = arith.constant 0 : i32
    %c0_i32_1 = arith.constant 0 : i32
    return %c0_i32, %c0_i32_0 : i32, i32
  }
  func.func @transform_4(%arg0: i32) -> (i32, i32) {
    %c0_i32 = arith.constant 0 : i32
    %c0_i32_0 = arith.constant 0 : i32
    %c0_i32_1 = arith.constant 0 : i32
    return %c0_i32, %c0_i32_0 : i32, i32
  }
  func.func @transform_5(%arg0: i32) -> (i32, i32) {
    %c0_i32 = arith.constant 0 : i32
    %c0_i32_0 = arith.constant 0 : i32
    return %arg0, %c0_i32 : i32, i32
  }
}

</mosaic_0001>

<llo_original>
// kernel: encoder_forward.1
$region0: #{encoder_forward.1}
  #allocation0 [shape = 'u32[]', space=smem, size = 0x4, offset = 0x4, fixed_abs, tag = 'smem constant byte address 0x4 - core index']
  #allocation1 [shape = 'u32[144,128]{1,0:T(1,128)}', space=vmem, size = 0x12000, scoped, tag = 'internal scratch']
  %s0 = inlined_call_operand.vmem [shape: bf16[8,32], index: 0, kind: input, shape index: {}]
  %s1 = inlined_call_operand.vmem [shape: bf16[32,128], index: 1, kind: input, shape index: {}]
  %s2 = inlined_call_operand.vmem [shape: f32[1,128], index: 2, kind: input, shape index: {}]
  %s3 = inlined_call_operand.hbm [shape: bf16[128,128], index: 3, kind: input, shape index: {}]
  %s4 = inlined_call_operand.vmem [shape: f32[1,128], index: 4, kind: input, shape index: {}]
  %s5 = inlined_call_operand.vmem [shape: f32[8,128], index: 5, kind: output, shape index: {}]
  %s6 = sld [smem:[#allocation0]]
  $region34: #{encoder_forward.1} parent=0
    _
  %s8 = ssub.s32 1, %s6
  %s9 = scalar_select 0, %s8, %s6
  $region1: #{encoder_forward.1} parent=0
    #allocation2 [shape = 'u8[32768]{0}', space=vmem, size = 0x8000, scoped, tag = 'input window, operand 3, single buffered']
    #allocation3 [shape = 's32[1]{0}', space=sflag, size = 0x4, scoped, tag = 'scoped memory for encoder_forward.1']
    %10 = vsyncpa [#allocation3], 0
    // Predicated region
    $region2: #{encoder_forward.1} parent=1 // pred_check
      _
    $region3: #{encoder_forward.1} parent=1 // pred_check_branch
      %12 = sbr.rel (0) target = $region5
    $region4: #{encoder_forward.1} parent=1 // pred_region
      _
    $region5: #{encoder_forward.1} parent=1 // pred_fallthru
      _
    // Predicated region
    $region6: #{encoder_forward.1} parent=1 // pred_check
      _
    $region7: #{encoder_forward.1} parent=1 // pred_check_branch
      %14 = sbr.rel (0) target = $region9
    $region8: #{encoder_forward.1} parent=1 // pred_region
      _
    $region9: #{encoder_forward.1} parent=1 // pred_fallthru
      _
    // Predicated region
    $region10: #{encoder_forward.1} parent=1 // pred_check
      _
    $region11: #{encoder_forward.1} parent=1 // pred_check_branch
      %16 = sbr.rel (0) target = $region13
    $region12: #{encoder_forward.1} parent=1 // pred_region
      _
    $region13: #{encoder_forward.1} parent=1 // pred_fallthru
      _
    // Predicated region
    $region14: #{encoder_forward.1} parent=1 // pred_check
      _
    $region15: #{encoder_forward.1} parent=1 // pred_check_branch
      %18 = sbr.rel (0) target = $region17
    $region16: #{encoder_forward.1} parent=1 // pred_region
      %s20 = ssub.s32 1024, 1024
      %21 = vsyncadd [#allocation3], %s20
      %s22 = sshll.u32 [#allocation2], 4
      %s23 = int_to_ptr.vmem [resolvable:$true] %s22
      %28 = dma.hbm_to_vmem [thread:$0]  %s3, 1024, %s23, [#allocation3], 64, 64, 4
    $region17: #{encoder_forward.1} parent=1 // pred_fallthru
      _
    // Predicated region
    $region18: #{encoder_forward.1} parent=1 // pred_check
      _
    $region19: #{encoder_forward.1} parent=1 // pred_check_branch
      %30 = sbr.rel (0) target = $region21
    $region20: #{encoder_forward.1} parent=1 // pred_region
      _
    $region21: #{encoder_forward.1} parent=1 // pred_fallthru
      _
    // Predicated region
    $region22: #{encoder_forward.1} parent=1 // pred_check
      _
    $region23: #{encoder_forward.1} parent=1 // pred_check_branch
      %32 = sbr.rel (0) target = $region25
    $region24: #{encoder_forward.1} parent=1 // pred_region
      %33 = dma.done [#allocation3], 1024
    $region25: #{encoder_forward.1} parent=1 // pred_fallthru
      _
    %v35 = vld [vmem:[%s0] sm:$0xf]
    %v36 = vld [vmem:[%s1] sm:$0xf]
    %v37 = vld [vmem:[%s1 + $0x4] sm:$0xf]
    %v38 = vld [vmem:[%s1 + $0x8] sm:$0xf]
    %v39 = vld [vmem:[%s1 + $0xc] sm:$0xf]
    %v40 = vld [vmem:[%s2] sm:$0x1]
    %v42 = vlaneseq
    %v43 = vshrl.u32 %v42, 7
    %v44 = vsub.s32 0, %v43
    %v45 = vrot.slane %v40, %v44
    %v51 = vunpack.c.l.b16 %v36
    %v52 = vunpack.c.l.b16 %v37
    %v53 = vunpack.c.l.b16 %v38
    %v54 = vunpack.c.l.b16 %v39
    %v55 = vpack.c.b16 %v52, %v51
    %v56 = vpack.c.b16 %v54, %v53
    %vm59 = vcmask 261120
    %v61 = vsel %vm59, %v35, 0
    %63 = vmatprep.subr.bf16.mxu0 0
    %64 = vmatpush1.bf16.msra.mxu0 %v55
    %65 = vmatprep.subr.bf16.mxu0 0
    %66 = vmatpush1.bf16.msra.mxu0 %v56
    %67 = vmatprep.subr.bf16.mxu0 0
    %68 = vmatpush1.bf16.msra.mxu0 0
    %69 = vmatprep.subr.bf16.mxu0 0
    %70 = vmatpush1.bf16.msra.mxu0 0
    %71 = vmatprep.subr.bf16.mxu0 0
    %72 = vmatpush1.bf16.msra.mxu0 0
    %73 = vmatprep.subr.bf16.mxu0 0
    %74 = vmatpush1.bf16.msra.mxu0 0
    %75 = vmatprep.subr.bf16.mxu0 0
    %76 = vmatpush1.bf16.msra.mxu0 0
    %77 = vmatprep.subr.bf16.mxu0 0
    %78 = vmatpush1.bf16.msra.mxu0 0
    %79 = vmatprep.subr.bf16.mxu0 0
    %80 = vmatpush1.bf16.msra.mxu0 0
    %81 = vmatprep.subr.bf16.mxu0 0
    %82 = vmatpush1.bf16.msra.mxu0 0
    %83 = vmatprep.subr.bf16.mxu0 0
    %84 = vmatpush1.bf16.msra.mxu0 0
    %85 = vmatprep.subr.bf16.mxu0 0
    %86 = vmatpush1.bf16.msra.mxu0 0
    %87 = vmatprep.subr.bf16.mxu0 0
    %88 = vmatpush1.bf16.msra.mxu0 0
    %89 = vmatprep.subr.bf16.mxu0 0
    %90 = vmatpush1.bf16.msra.mxu0 0
    %91 = vmatprep.subr.bf16.mxu0 0
    %92 = vmatpush1.bf16.msra.mxu0 0
    %93 = vmatprep.subr.bf16.mxu0 0
    %94 = vmatpush1.bf16.msra.mxu0 0
    %95 = vmatprep.mubr.bf16.mxu0 0
    %96 = vmatmul.mubr.bf16.gmra.mrb[0].mxu0 %v61
    %v97 = vpop.f32.mrb[0].mxu0
    %v98 = vadd.f32 %v45, %v97
    %v99 = vpop.f32.mrb[0].mxu0
    %v100 = vpop.f32.mrb[0].mxu0
    %v101 = vpop.f32.mrb[0].mxu0
    %102 = vdwg.mxu0
    %v103 = vmax.f32 %v98, 0.0
    %v104 = vpack.c.bf16 %v103, %v103
    %v105 = vld [vmem:[#allocation2] sm:$0xf]
    %v106 = vld [vmem:[#allocation2 + $0x4] sm:$0xf]
    %v107 = vld [vmem:[#allocation2 + $0x8] sm:$0xf]
    %v108 = vld [vmem:[#allocation2 + $0xc] sm:$0xf]
    %v109 = vld [vmem:[#allocation2 + $0x10] sm:$0xf]
    %v110 = vld [vmem:[#allocation2 + $0x14] sm:$0xf]
    %v111 = vld [vmem:[#allocation2 + $0x18] sm:$0xf]
    %v112 = vld [vmem:[#allocation2 + $0x1c] sm:$0xf]
    %v113 = vld [vmem:[#allocation2 + $0x20] sm:$0xf]
    %v114 = vld [vmem:[#allocation2 + $0x24] sm:$0xf]
    %v115 = vld [vmem:[#allocation2 + $0x28] sm:$0xf]
    %v116 = vld [vmem:[#allocation2 + $0x2c] sm:$0xf]
    %v117 = vld [vmem:[#allocation2 + $0x30] sm:$0xf]
    %v118 = vld [vmem:[#allocation2 + $0x34] sm:$0xf]
    %v119 = vld [vmem:[#allocation2 + $0x38] sm:$0xf]
    %v120 = vld [vmem:[#allocation2 + $0x3c] sm:$0xf]
    %v121 = vld [vmem:[%s4] sm:$0x1]
    %v123 = vlaneseq
    %v124 = vshrl.u32 %v123, 7
    %v125 = vsub.s32 0, %v124
    %v126 = vrot.slane %v121, %v125
    %v144 = vunpack.c.l.b16 %v105
    %v145 = vunpack.c.l.b16 %v106
    %v146 = vunpack.c.l.b16 %v107
    %v147 = vunpack.c.l.b16 %v108
    %v148 = vunpack.c.l.b16 %v109
    %v149 = vunpack.c.l.b16 %v110
    %v150 = vunpack.c.l.b16 %v111
    %v151 = vunpack.c.l.b16 %v112
    %v152 = vunpack.c.l.b16 %v113
    %v153 = vunpack.c.l.b16 %v114
    %v154 = vunpack.c.l.b16 %v115
    %v155 = vunpack.c.l.b16 %v116
    %v156 = vunpack.c.l.b16 %v117
    %v157 = vunpack.c.l.b16 %v118
    %v158 = vunpack.c.l.b16 %v119
    %v159 = vunpack.c.l.b16 %v120
    %v160 = vpack.c.b16 %v145, %v144
    %v161 = vpack.c.b16 %v147, %v146
    %v162 = vpack.c.b16 %v149, %v148
    %v163 = vpack.c.b16 %v151, %v150
    %v164 = vpack.c.b16 %v153, %v152
    %v165 = vpack.c.b16 %v155, %v154
    %v166 = vpack.c.b16 %v157, %v156
    %v167 = vpack.c.b16 %v159, %v158
    %176 = vmatprep.subr.bf16.mxu0 0
    %177 = vmatpush1.bf16.msra.mxu0 %v160
    %178 = vmatprep.subr.bf16.mxu0 0
    %179 = vmatpush1.bf16.msra.mxu0 %v161
    %180 = vmatprep.subr.bf16.mxu0 0
    %181 = vmatpush1.bf16.msra.mxu0 %v162
    %182 = vmatprep.subr.bf16.mxu0 0
    %183 = vmatpush1.bf16.msra.mxu0 %v163
    %184 = vmatprep.subr.bf16.mxu0 0
    %185 = vmatpush1.bf16.msra.mxu0 %v164
    %186 = vmatprep.subr.bf16.mxu0 0
    %187 = vmatpush1.bf16.msra.mxu0 %v165
    %188 = vmatprep.subr.bf16.mxu0 0
    %189 = vmatpush1.bf16.msra.mxu0 %v166
    %190 = vmatprep.subr.bf16.mxu0 0
    %191 = vmatpush1.bf16.msra.mxu0 %v167
    %192 = vmatprep.subr.bf16.mxu0 0
    %193 = vmatpush1.bf16.msra.mxu0 0
    %194 = vmatprep.subr.bf16.mxu0 0
    %195 = vmatpush1.bf16.msra.mxu0 0
    %196 = vmatprep.subr.bf16.mxu0 0
    %197 = vmatpush1.bf16.msra.mxu0 0
    %198 = vmatprep.subr.bf16.mxu0 0
    %199 = vmatpush1.bf16.msra.mxu0 0
    %200 = vmatprep.subr.bf16.mxu0 0
    %201 = vmatpush1.bf16.msra.mxu0 0
    %202 = vmatprep.subr.bf16.mxu0 0
    %203 = vmatpush1.bf16.msra.mxu0 0
    %204 = vmatprep.subr.bf16.mxu0 0
    %205 = vmatpush1.bf16.msra.mxu0 0
    %206 = vmatprep.subr.bf16.mxu0 0
    %207 = vmatpush1.bf16.msra.mxu0 0
    %208 = vmatprep.mubr.bf16.mxu0 0
    %209 = vmatmul.mubr.bf16.gmra.mrb[0].mxu0 %v104
    %v210 = vpop.f32.mrb[0].mxu0
    %v211 = vadd.f32 %v126, %v210
    %v212 = vpop.f32.mrb[0].mxu0
    %v213 = vpop.f32.mrb[0].mxu0
    %v214 = vpop.f32.mrb[0].mxu0
    %215 = vdwg.mxu0
    %216 = vst [vmem:[%s5] sm:$0xff] %v211
    // Predicated region
    $region26: #{encoder_forward.1} parent=1 // pred_check
      _
    $region27: #{encoder_forward.1} parent=1 // pred_check_branch
      %218 = sbr.rel (0) target = $region29
    $region28: #{encoder_forward.1} parent=1 // pred_region
      _
    $region29: #{encoder_forward.1} parent=1 // pred_fallthru
      _
    // Predicated region
    $region30: #{encoder_forward.1} parent=1 // pred_check
      _
    $region31: #{encoder_forward.1} parent=1 // pred_check_branch
      %220 = sbr.rel (0) target = $region33
    $region32: #{encoder_forward.1} parent=1 // pred_region
      _
    $region33: #{encoder_forward.1} parent=1 // pred_fallthru
      _
    %221 = vsyncpa [#allocation3], 1

</llo_original>
